<compile_context>
chip_gen: v7x
topology: tpu7x:2x2x1
jax: 0.10.0
libtpu: 0.0.40
codegen_flags: <defaults>
</compile_context>

<pallas_src>
import jax
import jax.numpy as jnp
from jax.experimental import pallas as pl
from jax.experimental.pallas import tpu as pltpu

_LANE = 128


# ---------------------------------------------------------------------------
# Small helpers
# ---------------------------------------------------------------------------

def _round_up(x, m):
    return ((x + m - 1) // m) * m


def _pad2(a, rows, cols):
    pr, pc = rows - a.shape[0], cols - a.shape[1]
    if pr == 0 and pc == 0:
        return a
    return jnp.pad(a, ((0, pr), (0, pc)))


def _vmem_capacity_bytes():
    """Generation-aware VMEM capacity (128 MiB on v5e/v6e, 64 MiB on v7x)."""
    try:
        info = pltpu.get_tpu_info()
        cap = int(getattr(info, "vmem_capacity_bytes", 0) or 0)
        if cap > 0:
            return cap
    except Exception:
        pass
    return 64 << 20          # conservative fallback (v7x-sized)


def _budgets():
    cap = _vmem_capacity_bytes()
    fused_budget = int(cap * 0.35)                     # whole-problem-in-VMEM path
    stream_budget = min(int(cap * 0.55), 96 << 20)     # per-step working set
    vmem_limit_cap = min(int(cap * 0.85), 112 << 20)   # scoped-VMEM request ceiling
    return fused_budget, stream_budget, vmem_limit_cap


def _clamp_limit(est, cap_limit):
    return int(min(max(est + (8 << 20), 16 << 20), cap_limit))


def _fused_est(n_p, f_in_p, hid_p, out_p):
    # f32 adj input block + loaded f32 value + in-kernel bf16 copy (conservative)
    adj = n_p * n_p * (4 + 4 + 2)
    small = n_p * (f_in_p + 2 * hid_p + 3 * out_p) * 4
    return adj + small + (2 << 20)


def _stream_est(tile_m, tile_k, n_p, f_max):
    resident = tile_k == n_p
    adj = 2 * tile_m * tile_k * 4 + tile_m * tile_k * 2   # f32 dbl-buf + bf16 value
    sup = (1 if resident else 2) * tile_k * f_max * 2     # support block(s), bf16
    outb = 2 * tile_m * f_max * 4                          # output block, dbl-buf
    acc = tile_m * f_max * 4                               # f32 accumulator scratch
    return adj + sup + outb + acc + (2 << 20)


def _plan_stream(n, f_max, budget):
    """Pick (tile_m, tile_k, n_padded).  Prefers large row tiles with the K dim
    resident (single K step); falls back to K-tiling for very large graphs."""
    base = _round_up(n, _LANE)
    # Resident-K candidates (largest row tile that fits without gross padding).
    for tm in (512, 256, 128):
        n_p = _round_up(n, tm)
        if tm > 128 and n_p > base * 5 // 4:
            continue      # too much padding waste for a small graph
        if _stream_est(tm, n_p, n_p, f_max) <= budget:
            return tm, n_p, n_p
    # K-tiled fallback (resident support matrix no longer fits the budget).
    for tm in (256, 128):
        tk = 4096
        while tk >= 128:
            n_p = _round_up(n, max(tm, tk))
            if n_p <= base * 5 // 4 and _stream_est(tm, tk, n_p, f_max) <= budget:
                return tm, tk, n_p
            tk //= 2
    return 128, 128, _round_up(n, _LANE)


def _block_spec(shape, index_map, single=False):
    """BlockSpec helper; residents with constant index_map request Buffered(1)
    so they are not double-buffered (saves VMEM, esp. on v7x)."""
    if single:
        try:
            return pl.BlockSpec(shape, index_map, pipeline_mode=pl.Buffered(1))
        except Exception:
            return pl.BlockSpec(shape, index_map)
    return pl.BlockSpec(shape, index_map)


# ---------------------------------------------------------------------------
# Kernels
# ---------------------------------------------------------------------------

def _fused_kernel(x_ref, adj_ref, w1_ref, b1_ref, w2_ref, b2_ref, out_ref):
    """Entire forward in one kernel (adj resident in VMEM, read from HBM once)."""
    adj_bf = adj_ref[...].astype(jnp.bfloat16)              # cast in-kernel
    s1 = jnp.dot(x_ref[...], w1_ref[...],
                 preferred_element_type=jnp.float32) + b1_ref[...]
    h = jnp.maximum(
        jnp.dot(adj_bf, s1.astype(jnp.bfloat16),
                preferred_element_type=jnp.float32), 0.0)
    # Dropout is identity in eval mode.
    s2 = jnp.dot(h, w2_ref[...],
                 preferred_element_type=jnp.float32) + b2_ref[...]
    out_ref[...] = jnp.dot(adj_bf, s2.astype(jnp.bfloat16),
                           preferred_element_type=jnp.float32)


def _linear_kernel(x_ref, w_ref, b_ref, out_ref):
    # out_tile = x_tile @ W + b   (f32 accumulation, lane-dense bf16 store)
    acc = jnp.dot(x_ref[...], w_ref[...], preferred_element_type=jnp.float32)
    out_ref[...] = (acc + b_ref[...]).astype(out_ref.dtype)


def _gcn_pass1_kernel(adj_ref, s1_ref, w2_ref, b2_ref, s2_ref, acc_ref):
    """support2_tile = relu(adj_tile @ support1) @ W2^T + b2, K-tiled reduction."""
    k = pl.program_id(1)

    @pl.when(k == 0)
    def _init():
        acc_ref[...] = jnp.zeros_like(acc_ref)

    # adj streamed as f32 from HBM; cast to bf16 in-kernel for the MXU.
    acc_ref[...] += jnp.dot(adj_ref[...].astype(jnp.bfloat16), s1_ref[...],
                            preferred_element_type=jnp.float32)

    @pl.when(k == pl.num_programs(1) - 1)
    def _finalize():
        h = jnp.maximum(acc_ref[...], 0.0)
        s2 = jnp.dot(h, w2_ref[...],
                     preferred_element_type=jnp.float32) + b2_ref[...]
        s2_ref[...] = s2.astype(s2_ref.dtype)


def _gcn_pass2_kernel(adj_ref, s2_ref, out_ref):
    """out_tile = adj_tile @ support2, accumulated directly in the f32 output."""
    k = pl.program_id(1)

    @pl.when(k == 0)
    def _init():
        out_ref[...] = jnp.zeros_like(out_ref)

    out_ref[...] += jnp.dot(adj_ref[...].astype(jnp.bfloat16), s2_ref[...],
                            preferred_element_type=jnp.float32)


# ---------------------------------------------------------------------------
# pallas_call wrappers
# ---------------------------------------------------------------------------

def _linear_rows(x, w, b, *, tile_m, out_dtype, vmem_limit, single_resident):
    n, f_in = x.shape
    f_out = w.shape[1]
    return pl.pallas_call(
        _linear_kernel,
        out_shape=jax.ShapeDtypeStruct((n, f_out), out_dtype),
        grid=(n // tile_m,),
        in_specs=[
            pl.BlockSpec((tile_m, f_in), lambda i: (i, 0)),
            _block_spec((f_in, f_out), lambda i: (0, 0), single=single_resident),
            _block_spec((1, f_out), lambda i: (0, 0), single=single_resident),
        ],
        out_specs=pl.BlockSpec((tile_m, f_out), lambda i: (i, 0)),
        compiler_params=pltpu.CompilerParams(
            dimension_semantics=("parallel",),
            vmem_limit_bytes=vmem_limit),
    )(x, w, b)


def _gcn_pass1(adj, s1, w2, b2, *, tile_m, tile_k, vmem_limit, single_resident):
    n = adj.shape[0]
    hid = s1.shape[1]
    out_dim = w2.shape[1]
    m_tiles, k_tiles = n // tile_m, n // tile_k
    resident = k_tiles == 1
    flops = 2 * n * n * hid + 2 * n * hid * out_dim
    bytes_accessed = (adj.size * 4
                      + (1 if resident else m_tiles) * s1.size * 2
                      + w2.size * 4 + b2.size * 4 + n * out_dim * 2)
    return pl.pallas_call(
        _gcn_pass1_kernel,
        out_shape=jax.ShapeDtypeStruct((n, out_dim), jnp.bfloat16),
        grid=(m_tiles, k_tiles),
        in_specs=[
            pl.BlockSpec((tile_m, tile_k), lambda i, k: (i, k)),   # adj slab (f32)
            _block_spec((tile_k, hid), lambda i, k: (k, 0),
                        single=single_resident and resident),       # support1
            _block_spec((hid, out_dim), lambda i, k: (0, 0),
                        single=single_resident),
            _block_spec((1, out_dim), lambda i, k: (0, 0),
                        single=single_resident),
        ],
        out_specs=pl.BlockSpec((tile_m, out_dim), lambda i, k: (i, 0)),
        scratch_shapes=[pltpu.VMEM((tile_m, hid), jnp.float32)],
        compiler_params=pltpu.CompilerParams(
            dimension_semantics=("parallel", "arbitrary"),
            vmem_limit_bytes=vmem_limit),
        cost_estimate=pl.CostEstimate(
            flops=int(flops), transcendentals=0,
            bytes_accessed=int(bytes_accessed)),
    )(adj, s1, w2, b2)


def _gcn_pass2(adj, s2, *, tile_m, tile_k, vmem_limit, single_resident):
    n = adj.shape[0]
    out_dim = s2.shape[1]
    m_tiles, k_tiles = n // tile_m, n // tile_k
    resident = k_tiles == 1
    flops = 2 * n * n * out_dim
    bytes_accessed = (adj.size * 4
                      + (1 if resident else m_tiles) * s2.size * 2
                      + n * out_dim * 4)
    return pl.pallas_call(
        _gcn_pass2_kernel,
        out_shape=jax.ShapeDtypeStruct((n, out_dim), jnp.float32),
        grid=(m_tiles, k_tiles),
        in_specs=[
            pl.BlockSpec((tile_m, tile_k), lambda i, k: (i, k)),   # adj slab (f32)
            _block_spec((tile_k, out_dim), lambda i, k: (k, 0),
                        single=single_resident and resident),       # support2
        ],
        out_specs=pl.BlockSpec((tile_m, out_dim), lambda i, k: (i, 0)),
        compiler_params=pltpu.CompilerParams(
            dimension_semantics=("parallel", "arbitrary"),
            vmem_limit_bytes=vmem_limit),
        cost_estimate=pl.CostEstimate(
            flops=int(flops), transcendentals=0,
            bytes_accessed=int(bytes_accessed)),
    )(adj, s2)


def _forward_streamed(x_p, adj_p, w1_p, b1_p, w2_p, b2_p, *, tile_m, tile_k,
                      vmem_limit, single_resident):
    support1 = _linear_rows(x_p, w1_p, b1_p, tile_m=tile_m,
                            out_dtype=jnp.bfloat16, vmem_limit=vmem_limit,
                            single_resident=single_resident)
    support2 = _gcn_pass1(adj_p, support1, w2_p, b2_p,
                          tile_m=tile_m, tile_k=tile_k,
                          vmem_limit=vmem_limit, single_resident=single_resident)
    return _gcn_pass2(adj_p, support2, tile_m=tile_m, tile_k=tile_k,
                      vmem_limit=vmem_limit, single_resident=single_resident)


# ---------------------------------------------------------------------------
# Public forward
# ---------------------------------------------------------------------------

def gcn_encoder(x, adj, w1_t, b1, w2_t, b2, *, force_streamed=False,
                stream_plan=None):
    """GCNEncoder forward (eval mode).

    x: [N, F_in] f32, adj: [N, N] f32, w*_t: [F_in, F_out] f32 (= W^T),
    b*: [F_out] f32.  Returns [N, F_out2] f32.
    """
    n, f_in = x.shape
    hid = w1_t.shape[1]
    out_dim = w2_t.shape[1]

    f_in_p = _round_up(f_in, _LANE)
    hid_p = _round_up(hid, _LANE)
    out_p = _round_up(out_dim, _LANE)
    f_max = max(f_in_p, hid_p, out_p)

    fused_budget, stream_budget, vmem_cap = _budgets()

    w1_p = _pad2(jnp.asarray(w1_t, jnp.float32), f_in_p, hid_p)
    w2_p = _pad2(jnp.asarray(w2_t, jnp.float32), hid_p, out_p)
    b1_p = _pad2(jnp.asarray(b1, jnp.float32).reshape(1, -1), 1, hid_p)
    b2_p = _pad2(jnp.asarray(b2, jnp.float32).reshape(1, -1), 1, out_p)

    # ---- Fused fast path: whole problem resident in VMEM, adj read once ----
    n_p128 = _round_up(n, _LANE)
    fused_est = _fused_est(n_p128, f_in_p, hid_p, out_p)
    if (not force_streamed) and fused_est <= fused_budget:
        n_p = n_p128
        x_p = _pad2(x.astype(jnp.float32), n_p, f_in_p)
        adj_p = _pad2(adj.astype(jnp.float32), n_p, n_p)
        out = pl.pallas_call(
            _fused_kernel,
            out_shape=jax.ShapeDtypeStruct((n_p, out_p), jnp.float32),
            compiler_params=pltpu.CompilerParams(
                vmem_limit_bytes=_clamp_limit(fused_est, vmem_cap)),
        )(x_p, adj_p, w1_p, b1_p, w2_p, b2_p)
        return out[:n, :out_dim]

    # ---- Streamed path: adj (f32) streamed twice, cast to bf16 in-kernel ----
    if stream_plan is None:
        tile_m, tile_k, n_p = _plan_stream(n, f_max, stream_budget)
    else:
        tile_m, tile_k = stream_plan
        n_p = _round_up(n, max(tile_m, tile_k))
    vmem_limit = _clamp_limit(_stream_est(tile_m, tile_k, n_p, f_max), vmem_cap)

    x_p = _pad2(x.astype(jnp.float32), n_p, f_in_p)
    # Zero row/column padding of adj keeps the math exact (bias leakage in
    # padded support rows is multiplied by zero adj columns).  No bf16 cast
    # round trip here -- the cast happens in-kernel on each streamed slab.
    adj_p = _pad2(adj.astype(jnp.float32), n_p, n_p)

    try:
        out = _forward_streamed(x_p, adj_p, w1_p, b1_p, w2_p, b2_p,
                                tile_m=tile_m, tile_k=tile_k,
                                vmem_limit=vmem_limit, single_resident=True)
    except Exception:
        # Fallback if pl.Buffered(1) single-buffering is unsupported here.
        out = _forward_streamed(x_p, adj_p, w1_p, b1_p, w2_p, b2_p,
                                tile_m=tile_m, tile_k=tile_k,
                                vmem_limit=vmem_limit, single_resident=False)
    return out[:n, :out_dim]


# ---------------------------------------------------------------------------
# Demo / self-check
# ---------------------------------------------------------------------------

def _linear_params(key, in_features, out_features):
    """Deterministic nn.Linear-style init: U(-1/sqrt(in), 1/sqrt(in))."""
    kw, kb = jax.random.split(key)
    bound = 1.0 / (in_features ** 0.5)
    w = jax.random.uniform(kw, (out_features, in_features), jnp.float32,
                           -bound, bound)
    b = jax.random.uniform(kb, (out_features,), jnp.float32, -bound, bound)
    return w, b


def _make_inputs(key, n, input_dim, hidden_dim, output_dim):
    kx, kadj, k1, k2 = jax.random.split(key, 4)
    x = jax.random.normal(kx, (n, input_dim), dtype=jnp.float32)
    a = jax.random.uniform(kadj, (n, n), dtype=jnp.float32)
    adj = (a + a.T) * 0.5 + jnp.eye(n, dtype=jnp.float32)
    adj = adj / jnp.sum(adj, axis=1, keepdims=True)
    w1, b1 = _linear_params(k1, input_dim, hidden_dim)
    w2, b2 = _linear_params(k2, hidden_dim, output_dim)
    return x, adj, w1.T, b1, w2.T, b2


def _reference(x, adj, w1_t, b1, w2_t, b2):
    # Pure-JAX reference mirroring the kernels' bf16 rounding of the
    # adjacency-aggregation operands (accumulation stays f32).
    hp = jax.lax.Precision.HIGHEST
    bf = lambda v: v.astype(jnp.bfloat16).astype(jnp.float32)
    s1 = jnp.dot(x, w1_t, precision=hp) + b1
    h = jnp.maximum(jnp.dot(bf(adj), bf(s1), precision=hp), 0.0)
    s2 = jnp.dot(h, w2_t, precision=hp) + b2
    return jnp.dot(bf(adj), bf(s2), precision=hp)


if __name__ == "__main__":
    key = jax.random.PRNGKey(0)
    k_small, k_big = jax.random.split(key)

    # 1) Small graph (module's demo shapes) -> fused single-kernel path.
    N, input_dim, hidden_dim, output_dim = 16, 8, 32, 16
    args = _make_inputs(k_small, N, input_dim, hidden_dim, output_dim)
    out = jax.block_until_ready(gcn_encoder(*args))
    ref = _reference(*args)
    assert out.shape == (N, output_dim)
    assert jnp.allclose(out, ref, atol=2e-2, rtol=2e-2), "fused path mismatch"

    # 2) Larger graph -> streamed two-pass path (resident support, Buffered(1)).
    N2 = 640
    args2 = _make_inputs(k_big, N2, input_dim, hidden_dim, output_dim)
    ref2 = _reference(*args2)
    out2 = jax.block_until_ready(gcn_encoder(*args2, force_streamed=True))
    assert out2.shape == (N2, output_dim)
    assert jnp.allclose(out2, ref2, atol=2e-2, rtol=2e-2), "streamed path mismatch"

    # 3) Same graph with forced K-tiling (exercises pl.when accumulate path).
    out3 = jax.block_until_ready(
        gcn_encoder(*args2, force_streamed=True, stream_plan=(128, 256)))
    assert jnp.allclose(out3, ref2, atol=2e-2, rtol=2e-2), "K-tiled path mismatch"

    print("KERNEL_OK")
</pallas_src>

<mosaic_0001>
module attributes {stable_mosaic.version = 11 : i64} {
  func.func @_fused_kernel(%arg0: memref<128x128xf32, #tpu.memory_space<vmem>>, %arg1: memref<128x128xf32, #tpu.memory_space<vmem>>, %arg2: memref<128x128xf32, #tpu.memory_space<vmem>>, %arg3: memref<1x128xf32, #tpu.memory_space<vmem>>, %arg4: memref<128x128xf32, #tpu.memory_space<vmem>>, %arg5: memref<1x128xf32, #tpu.memory_space<vmem>>, %arg6: memref<128x128xf32, #tpu.memory_space<vmem>>) attributes {dimension_semantics = [], scalar_prefetch = 0 : i64, scratch_operands = 0 : i64, tpu.core_type = #tpu.core_type<tc>} {
    %c0 = arith.constant 0 : index
    %c0_0 = arith.constant 0 : index
    %0 = vector.load %arg1[%c0, %c0_0] : memref<128x128xf32, #tpu.memory_space<vmem>>, vector<128x128xf32>
    %1 = arith.truncf %0 : vector<128x128xf32> to vector<128x128xbf16>
    %c0_1 = arith.constant 0 : index
    %c0_2 = arith.constant 0 : index
    %2 = vector.load %arg0[%c0_1, %c0_2] : memref<128x128xf32, #tpu.memory_space<vmem>>, vector<128x128xf32>
    %c0_3 = arith.constant 0 : index
    %c0_4 = arith.constant 0 : index
    %3 = vector.load %arg2[%c0_3, %c0_4] : memref<128x128xf32, #tpu.memory_space<vmem>>, vector<128x128xf32>
    %cst = arith.constant dense<0.000000e+00> : vector<128x128xf32>
    %4 = tpu.matmul %2, %3, %cst {dimension_numbers = #tpu.dot_dimension_numbers<[1], [0], [0], [1], [0, 0, 1, 1], [], []>} : vector<128x128xf32>, vector<128x128xf32>, vector<128x128xf32> -> vector<128x128xf32>
    %c0_5 = arith.constant 0 : index
    %c0_6 = arith.constant 0 : index
    %5 = vector.load %arg3[%c0_5, %c0_6] : memref<1x128xf32, #tpu.memory_space<vmem>>, vector<1x128xf32>
    %6 = vector.broadcast %5 : vector<1x128xf32> to vector<128x128xf32>
    %7 = arith.addf %4, %6 : vector<128x128xf32>
    %8 = arith.truncf %7 : vector<128x128xf32> to vector<128x128xbf16>
    %cst_7 = arith.constant dense<0.000000e+00> : vector<128x128xf32>
    %9 = tpu.matmul %1, %8, %cst_7 {dimension_numbers = #tpu.dot_dimension_numbers<[1], [0], [0], [1], [0, 0, 1, 1], [], []>} : vector<128x128xbf16>, vector<128x128xbf16>, vector<128x128xf32> -> vector<128x128xf32>
    %cst_8 = arith.constant 0.000000e+00 : f32
    %10 = vector.broadcast %cst_8 : f32 to vector<128x128xf32>
    %11 = arith.maximumf %9, %10 : vector<128x128xf32>
    %c0_9 = arith.constant 0 : index
    %c0_10 = arith.constant 0 : index
    %12 = vector.load %arg4[%c0_9, %c0_10] : memref<128x128xf32, #tpu.memory_space<vmem>>, vector<128x128xf32>
    %cst_11 = arith.constant dense<0.000000e+00> : vector<128x128xf32>
    %13 = tpu.matmul %11, %12, %cst_11 {dimension_numbers = #tpu.dot_dimension_numbers<[1], [0], [0], [1], [0, 0, 1, 1], [], []>} : vector<128x128xf32>, vector<128x128xf32>, vector<128x128xf32> -> vector<128x128xf32>
    %c0_12 = arith.constant 0 : index
    %c0_13 = arith.constant 0 : index
    %14 = vector.load %arg5[%c0_12, %c0_13] : memref<1x128xf32, #tpu.memory_space<vmem>>, vector<1x128xf32>
    %15 = vector.broadcast %14 : vector<1x128xf32> to vector<128x128xf32>
    %16 = arith.addf %13, %15 : vector<128x128xf32>
    %17 = arith.truncf %16 : vector<128x128xf32> to vector<128x128xbf16>
    %cst_14 = arith.constant dense<0.000000e+00> : vector<128x128xf32>
    %18 = tpu.matmul %1, %17, %cst_14 {dimension_numbers = #tpu.dot_dimension_numbers<[1], [0], [0], [1], [0, 0, 1, 1], [], []>} : vector<128x128xbf16>, vector<128x128xbf16>, vector<128x128xf32> -> vector<128x128xf32>
    %c0_15 = arith.constant 0 : index
    %c0_16 = arith.constant 0 : index
    %19 = vector.load %arg6[%c0_15, %c0_16] : memref<128x128xf32, #tpu.memory_space<vmem>>, vector<128x128xf32>
    tpu.vector_store %arg6[%c0_15, %c0_16], %18 {strides = array<i32>} : memref<128x128xf32, #tpu.memory_space<vmem>>, vector<128x128xf32>,
    return
  }
}

</mosaic_0001>

<llo_original>
// kernel: tpu_custom_call.1
$region0: #{tpu_custom_call.1}
  #allocation0 [shape = 'u32[]', space=smem, size = 0x4, offset = 0x4, fixed_abs, tag = 'smem constant byte address 0x4 - core index']
  #allocation1 [shape = 'u32[144,128]{1,0:T(1,128)}', space=vmem, size = 0x12000, scoped, tag = 'internal scratch']
  %s0 = inlined_call_operand.hbm [shape: f32[128,128], index: 0, kind: input, shape index: {}]
  %s1 = inlined_call_operand.hbm [shape: f32[128,128], index: 1, kind: input, shape index: {}]
  %s2 = inlined_call_operand.hbm [shape: f32[128,128], index: 2, kind: input, shape index: {}]
  %s3 = inlined_call_operand.vmem [shape: f32[1,128], index: 3, kind: input, shape index: {}]
  %s4 = inlined_call_operand.hbm [shape: f32[128,128], index: 4, kind: input, shape index: {}]
  %s5 = inlined_call_operand.vmem [shape: f32[1,128], index: 5, kind: input, shape index: {}]
  %s6 = inlined_call_operand.hbm [shape: f32[128,128], index: 6, kind: output, shape index: {}]
  %s7 = sld [smem:[#allocation0]]
  $region50: #{tpu_custom_call.1} parent=0
    _
  %s9 = ssub.s32 1, %s7
  %s10 = scalar_select 0, %s9, %s7
  $region1: #{tpu_custom_call.1} parent=0
    #allocation2 [shape = 'u8[65536]{0}', space=vmem, size = 0x10000, scoped, tag = 'input window, operand 0, single buffered']
    #allocation3 [shape = 's32[1]{0}', space=sflag, size = 0x4, scoped, tag = 'scoped memory for tpu_custom_call.1']
    #allocation4 [shape = 's32[1]{0}', space=sflag, size = 0x4, scoped, tag = 'scoped memory for tpu_custom_call.1']
    #allocation5 [shape = 'u8[65536]{0}', space=vmem, size = 0x10000, scoped, tag = 'input window, operand 1, single buffered']
    #allocation6 [shape = 's32[1]{0}', space=sflag, size = 0x4, scoped, tag = 'scoped memory for tpu_custom_call.1']
    #allocation7 [shape = 'u8[65536]{0}', space=vmem, size = 0x10000, scoped, tag = 'input window, operand 2, single buffered']
    #allocation8 [shape = 'u8[65536]{0}', space=vmem, size = 0x10000, scoped, tag = 'input window, operand 4, single buffered']
    #allocation9 [shape = 's32[1]{0}', space=sflag, size = 0x4, scoped, tag = 'scoped memory for tpu_custom_call.1']
    #allocation10 [shape = 'u8[65536]{0}', space=vmem, size = 0x10000, scoped, tag = 'output window, operand 0, single buffered']
    %11 = vsyncpa [#allocation3], 0
    %12 = vsyncpa [#allocation6], 0
    %13 = vsyncpa [#allocation9], 0
    %14 = vsyncpa [#allocation4], 0
    // Predicated region
    $region2: #{tpu_custom_call.1} parent=1 // pred_check
      _
    $region3: #{tpu_custom_call.1} parent=1 // pred_check_branch
      %16 = sbr.rel (0) target = $region5
    $region4: #{tpu_custom_call.1} parent=1 // pred_region
      %s18 = ssub.s32 2048, 2048
      %19 = vsyncadd [#allocation3], %s18
      %s20 = sshll.u32 [#allocation2], 4
      %s21 = int_to_ptr.vmem [resolvable:$true] %s20
      %26 = dma.hbm_to_vmem [thread:$0]  %s0, 2048, %s21, [#allocation3], 128, 128, 8
    $region5: #{tpu_custom_call.1} parent=1 // pred_fallthru
      _
    // Predicated region
    $region6: #{tpu_custom_call.1} parent=1 // pred_check
      _
    $region7: #{tpu_custom_call.1} parent=1 // pred_check_branch
      %28 = sbr.rel (0) target = $region9
    $region8: #{tpu_custom_call.1} parent=1 // pred_region
      %s30 = ssub.s32 2048, 2048
      %31 = vsyncadd [#allocation6], %s30
      %s32 = sshll.u32 [#allocation5], 4
      %s33 = int_to_ptr.vmem [resolvable:$true] %s32
      %38 = dma.hbm_to_vmem [thread:$0]  %s1, 2048, %s33, [#allocation6], 128, 128, 8
    $region9: #{tpu_custom_call.1} parent=1 // pred_fallthru
      _
    // Predicated region
    $region10: #{tpu_custom_call.1} parent=1 // pred_check
      _
    $region11: #{tpu_custom_call.1} parent=1 // pred_check_branch
      %40 = sbr.rel (0) target = $region13
    $region12: #{tpu_custom_call.1} parent=1 // pred_region
      %s42 = ssub.s32 2048, 2048
      %43 = vsyncadd [#allocation6], %s42
      %s44 = sshll.u32 [#allocation7], 4
      %s45 = int_to_ptr.vmem [resolvable:$true] %s44
      %50 = dma.hbm_to_vmem [thread:$0]  %s2, 2048, %s45, [#allocation6], 128, 128, 8
    $region13: #{tpu_custom_call.1} parent=1 // pred_fallthru
      _
    // Predicated region
    $region14: #{tpu_custom_call.1} parent=1 // pred_check
      _
    $region15: #{tpu_custom_call.1} parent=1 // pred_check_branch
      %52 = sbr.rel (0) target = $region17
    $region16: #{tpu_custom_call.1} parent=1 // pred_region
      _
    $region17: #{tpu_custom_call.1} parent=1 // pred_fallthru
      _
    // Predicated region
    $region18: #{tpu_custom_call.1} parent=1 // pred_check
      _
    $region19: #{tpu_custom_call.1} parent=1 // pred_check_branch
      %54 = sbr.rel (0) target = $region21
    $region20: #{tpu_custom_call.1} parent=1 // pred_region
      %s56 = ssub.s32 2048, 2048
      %57 = vsyncadd [#allocation9], %s56
      %s58 = sshll.u32 [#allocation8], 4
      %s59 = int_to_ptr.vmem [resolvable:$true] %s58
      %64 = dma.hbm_to_vmem [thread:$0]  %s4, 2048, %s59, [#allocation9], 128, 128, 8
    $region21: #{tpu_custom_call.1} parent=1 // pred_fallthru
      _
    // Predicated region
    $region22: #{tpu_custom_call.1} parent=1 // pred_check
      _
    $region23: #{tpu_custom_call.1} parent=1 // pred_check_branch
      %66 = sbr.rel (0) target = $region25
    $region24: #{tpu_custom_call.1} parent=1 // pred_region
      _
    $region25: #{tpu_custom_call.1} parent=1 // pred_fallthru
      _
    // Predicated region
    $region26: #{tpu_custom_call.1} parent=1 // pred_check
      _
    $region27: #{tpu_custom_call.1} parent=1 // pred_check_branch
      %68 = sbr.rel (0) target = $region29
    $region28: #{tpu_custom_call.1} parent=1 // pred_region
      %69 = dma.done [#allocation3], 2048
    $region29: #{tpu_custom_call.1} parent=1 // pred_fallthru
      _
    // Predicated region
    $region30: #{tpu_custom_call.1} parent=1 // pred_check
      _
    $region31: #{tpu_custom_call.1} parent=1 // pred_check_branch
      %71 = sbr.rel (0) target = $region33
    $region32: #{tpu_custom_call.1} parent=1 // pred_region
      %72 = dma.done [#allocation6], 2048
    $region33: #{tpu_custom_call.1} parent=1 // pred_fallthru
      _
    // Predicated region
    $region34: #{tpu_custom_call.1} parent=1 // pred_check
      _
    $region35: #{tpu_custom_call.1} parent=1 // pred_check_branch
      %74 = sbr.rel (0) target = $region37
    $region36: #{tpu_custom_call.1} parent=1 // pred_region
      %75 = dma.done [#allocation6], 2048
    $region37: #{tpu_custom_call.1} parent=1 // pred_fallthru
      _
    // Predicated region
    $region38: #{tpu_custom_call.1} parent=1 // pred_check
      _
    $region39: #{tpu_custom_call.1} parent=1 // pred_check_branch
      %77 = sbr.rel (0) target = $region41
    $region40: #{tpu_custom_call.1} parent=1 // pred_region
      %78 = dma.done [#allocation9], 2048
    $region41: #{tpu_custom_call.1} parent=1 // pred_fallthru
      _
    %v80 = vld [vmem:[#allocation5] sm:$0xff]
    %v81 = vld [vmem:[#allocation5 + $0x8] sm:$0xff]
    %v82 = vld [vmem:[#allocation5 + $0x10] sm:$0xff]
    %v83 = vld [vmem:[#allocation5 + $0x18] sm:$0xff]
    %v84 = vld [vmem:[#allocation5 + $0x20] sm:$0xff]
    %v85 = vld [vmem:[#allocation5 + $0x28] sm:$0xff]
    %v86 = vld [vmem:[#allocation5 + $0x30] sm:$0xff]
    %v87 = vld [vmem:[#allocation5 + $0x38] sm:$0xff]
    %v88 = vld [vmem:[#allocation5 + $0x40] sm:$0xff]
    %v89 = vld [vmem:[#allocation5 + $0x48] sm:$0xff]
    %v90 = vld [vmem:[#allocation5 + $0x50] sm:$0xff]
    %v91 = vld [vmem:[#allocation5 + $0x58] sm:$0xff]
    %v92 = vld [vmem:[#allocation5 + $0x60] sm:$0xff]
    %v93 = vld [vmem:[#allocation5 + $0x68] sm:$0xff]
    %v94 = vld [vmem:[#allocation5 + $0x70] sm:$0xff]
    %v95 = vld [vmem:[#allocation5 + $0x78] sm:$0xff]
    %v96 = vpack.c.bf16 %v81, %v80
    %v97 = vpack.c.bf16 %v83, %v82
    %v98 = vpack.c.bf16 %v85, %v84
    %v99 = vpack.c.bf16 %v87, %v86
    %v100 = vpack.c.bf16 %v89, %v88
    %v101 = vpack.c.bf16 %v91, %v90
    %v102 = vpack.c.bf16 %v93, %v92
    %v103 = vpack.c.bf16 %v95, %v94
    %v104 = vld [vmem:[#allocation2] sm:$0xff]
    %v105 = vld [vmem:[#allocation2 + $0x8] sm:$0xff]
    %v106 = vld [vmem:[#allocation2 + $0x10] sm:$0xff]
    %v107 = vld [vmem:[#allocation2 + $0x18] sm:$0xff]
    %v108 = vld [vmem:[#allocation2 + $0x20] sm:$0xff]
    %v109 = vld [vmem:[#allocation2 + $0x28] sm:$0xff]
    %v110 = vld [vmem:[#allocation2 + $0x30] sm:$0xff]
    %v111 = vld [vmem:[#allocation2 + $0x38] sm:$0xff]
    %v112 = vld [vmem:[#allocation2 + $0x40] sm:$0xff]
    %v113 = vld [vmem:[#allocation2 + $0x48] sm:$0xff]
    %v114 = vld [vmem:[#allocation2 + $0x50] sm:$0xff]
    %v115 = vld [vmem:[#allocation2 + $0x58] sm:$0xff]
    %v116 = vld [vmem:[#allocation2 + $0x60] sm:$0xff]
    %v117 = vld [vmem:[#allocation2 + $0x68] sm:$0xff]
    %v118 = vld [vmem:[#allocation2 + $0x70] sm:$0xff]
    %v119 = vld [vmem:[#allocation2 + $0x78] sm:$0xff]
    %v120 = vld [vmem:[#allocation7] sm:$0xff]
    %v121 = vld [vmem:[#allocation7 + $0x8] sm:$0xff]
    %v122 = vld [vmem:[#allocation7 + $0x10] sm:$0xff]
    %v123 = vld [vmem:[#allocation7 + $0x18] sm:$0xff]
    %v124 = vld [vmem:[#allocation7 + $0x20] sm:$0xff]
    %v125 = vld [vmem:[#allocation7 + $0x28] sm:$0xff]
    %v126 = vld [vmem:[#allocation7 + $0x30] sm:$0xff]
    %v127 = vld [vmem:[#allocation7 + $0x38] sm:$0xff]
    %v128 = vld [vmem:[#allocation7 + $0x40] sm:$0xff]
    %v129 = vld [vmem:[#allocation7 + $0x48] sm:$0xff]
    %v130 = vld [vmem:[#allocation7 + $0x50] sm:$0xff]
    %v131 = vld [vmem:[#allocation7 + $0x58] sm:$0xff]
    %v132 = vld [vmem:[#allocation7 + $0x60] sm:$0xff]
    %v133 = vld [vmem:[#allocation7 + $0x68] sm:$0xff]
    %v134 = vld [vmem:[#allocation7 + $0x70] sm:$0xff]
    %v135 = vld [vmem:[#allocation7 + $0x78] sm:$0xff]
    %v136 = vld [vmem:[%s3] sm:$0x1]
    %v138 = vlaneseq
    %v139 = vshrl.u32 %v138, 7
    %v140 = vsub.s32 0, %v139
    %v141 = vrot.slane %v136, %v140
    %143 = vmatprep.subr.mxu0 0.0
    %144 = vmatpush1.msra.mxu0 %v120
    %145 = vmatprep.subr.mxu0 0.0
    %146 = vmatpush1.msra.mxu0 %v121
    %147 = vmatprep.subr.mxu0 0.0
    %148 = vmatpush1.msra.mxu0 %v122
    %149 = vmatprep.subr.mxu0 0.0
    %150 = vmatpush1.msra.mxu0 %v123
    %151 = vmatprep.subr.mxu0 0.0
    %152 = vmatpush1.msra.mxu0 %v124
    %153 = vmatprep.subr.mxu0 0.0
    %154 = vmatpush1.msra.mxu0 %v125
    %155 = vmatprep.subr.mxu0 0.0
    %156 = vmatpush1.msra.mxu0 %v126
    %157 = vmatprep.subr.mxu0 0.0
    %158 = vmatpush1.msra.mxu0 %v127
    %159 = vmatprep.subr.mxu0 0.0
    %160 = vmatpush1.msra.mxu0 %v128
    %161 = vmatprep.subr.mxu0 0.0
    %162 = vmatpush1.msra.mxu0 %v129
    %163 = vmatprep.subr.mxu0 0.0
    %164 = vmatpush1.msra.mxu0 %v130
    %165 = vmatprep.subr.mxu0 0.0
    %166 = vmatpush1.msra.mxu0 %v131
    %167 = vmatprep.subr.mxu0 0.0
    %168 = vmatpush1.msra.mxu0 %v132
    %169 = vmatprep.subr.mxu0 0.0
    %170 = vmatpush1.msra.mxu0 %v133
    %171 = vmatprep.subr.mxu0 0.0
    %172 = vmatpush1.msra.mxu0 %v134
    %173 = vmatprep.subr.mxu0 0.0
    %174 = vmatpush1.msra.mxu0 %v135
    %175 = vmatprep.subr.mxu0 0.0
    %176 = vmatpush1.msra.mxu0 0.0
    %177 = vmatprep.subr.mxu0 0.0
    %178 = vmatpush1.msra.mxu0 0.0
    %179 = vmatprep.subr.mxu0 0.0
    %180 = vmatpush1.msra.mxu0 0.0
    %181 = vmatprep.subr.mxu0 0.0
    %182 = vmatpush1.msra.mxu0 0.0
    %183 = vmatprep.subr.mxu0 0.0
    %184 = vmatpush1.msra.mxu0 0.0
    %185 = vmatprep.subr.mxu0 0.0
    %186 = vmatpush1.msra.mxu0 0.0
    %187 = vmatprep.subr.mxu0 0.0
    %188 = vmatpush1.msra.mxu0 0.0
    %189 = vmatprep.subr.mxu0 0.0
    %190 = vmatpush1.msra.mxu0 0.0
    %191 = vmatprep.subr.mxu0 0.0
    %192 = vmatpush1.msra.mxu0 0.0
    %193 = vmatprep.subr.mxu0 0.0
    %194 = vmatpush1.msra.mxu0 0.0
    %195 = vmatprep.subr.mxu0 0.0
    %196 = vmatpush1.msra.mxu0 0.0
    %197 = vmatprep.subr.mxu0 0.0
    %198 = vmatpush1.msra.mxu0 0.0
    %199 = vmatprep.subr.mxu0 0.0
    %200 = vmatpush1.msra.mxu0 0.0
    %201 = vmatprep.subr.mxu0 0.0
    %202 = vmatpush1.msra.mxu0 0.0
    %203 = vmatprep.subr.mxu0 0.0
    %204 = vmatpush1.msra.mxu0 0.0
    %205 = vmatprep.subr.mxu0 0.0
    %206 = vmatpush1.msra.mxu0 0.0
    %207 = vmatprep.mubr.f32.mxu0 0.0
    %208 = vmatmul.mubr.f32.gmra.mrb[0].mxu0 %v104
    %v209 = vpop.f32.mrb[0].mxu0
    %v210 = vadd.f32 %v141, %v209
    %v211 = vpop.f32.mrb[0].mxu0
    %212 = vmatprep.mubr.f32.mxu0 0.0
    %213 = vmatmul.mubr.f32.gmra.mrb[0].mxu0 %v105
    %v214 = vpop.f32.mrb[0].mxu0
    %v215 = vadd.f32 %v141, %v214
    %v216 = vpop.f32.mrb[0].mxu0
    %217 = vmatprep.mubr.f32.mxu0 0.0
    %218 = vmatmul.mubr.f32.gmra.mrb[0].mxu0 %v106
    %v219 = vpop.f32.mrb[0].mxu0
    %v220 = vadd.f32 %v141, %v219
    %v221 = vpop.f32.mrb[0].mxu0
    %222 = vmatprep.mubr.f32.mxu0 0.0
    %223 = vmatmul.mubr.f32.gmra.mrb[0].mxu0 %v107
    %v224 = vpop.f32.mrb[0].mxu0
    %v225 = vadd.f32 %v141, %v224
    %v226 = vpop.f32.mrb[0].mxu0
    %227 = vmatprep.mubr.f32.mxu0 0.0
    %228 = vmatmul.mubr.f32.gmra.mrb[0].mxu0 %v108
    %v229 = vpop.f32.mrb[0].mxu0
    %v230 = vadd.f32 %v141, %v229
    %v231 = vpop.f32.mrb[0].mxu0
    %232 = vmatprep.mubr.f32.mxu0 0.0
    %233 = vmatmul.mubr.f32.gmra.mrb[0].mxu0 %v109
    %v234 = vpop.f32.mrb[0].mxu0
    %v235 = vadd.f32 %v141, %v234
    %v236 = vpop.f32.mrb[0].mxu0
    %237 = vmatprep.mubr.f32.mxu0 0.0
    %238 = vmatmul.mubr.f32.gmra.mrb[0].mxu0 %v110
    %v239 = vpop.f32.mrb[0].mxu0
    %v240 = vadd.f32 %v141, %v239
    %v241 = vpop.f32.mrb[0].mxu0
    %242 = vmatprep.mubr.f32.mxu0 0.0
    %243 = vmatmul.mubr.f32.gmra.mrb[0].mxu0 %v111
    %v244 = vpop.f32.mrb[0].mxu0
    %v245 = vadd.f32 %v141, %v244
    %v246 = vpop.f32.mrb[0].mxu0
    %247 = vmatprep.mubr.f32.mxu0 0.0
    %248 = vmatmul.mubr.f32.gmra.mrb[0].mxu0 %v112
    %v249 = vpop.f32.mrb[0].mxu0
    %v250 = vadd.f32 %v141, %v249
    %v251 = vpop.f32.mrb[0].mxu0
    %252 = vmatprep.mubr.f32.mxu0 0.0
    %253 = vmatmul.mubr.f32.gmra.mrb[0].mxu0 %v113
    %v254 = vpop.f32.mrb[0].mxu0
    %v255 = vadd.f32 %v141, %v254
    %v256 = vpop.f32.mrb[0].mxu0
    %257 = vmatprep.mubr.f32.mxu0 0.0
    %258 = vmatmul.mubr.f32.gmra.mrb[0].mxu0 %v114
    %v259 = vpop.f32.mrb[0].mxu0
    %v260 = vadd.f32 %v141, %v259
    %v261 = vpop.f32.mrb[0].mxu0
    %262 = vmatprep.mubr.f32.mxu0 0.0
    %263 = vmatmul.mubr.f32.gmra.mrb[0].mxu0 %v115
    %v264 = vpop.f32.mrb[0].mxu0
    %v265 = vadd.f32 %v141, %v264
    %v266 = vpop.f32.mrb[0].mxu0
    %267 = vmatprep.mubr.f32.mxu0 0.0
    %268 = vmatmul.mubr.f32.gmra.mrb[0].mxu0 %v116
    %v269 = vpop.f32.mrb[0].mxu0
    %v270 = vadd.f32 %v141, %v269
    %v271 = vpop.f32.mrb[0].mxu0
    %272 = vmatprep.mubr.f32.mxu0 0.0
    %273 = vmatmul.mubr.f32.gmra.mrb[0].mxu0 %v117
    %v274 = vpop.f32.mrb[0].mxu0
    %v275 = vadd.f32 %v141, %v274
    %v276 = vpop.f32.mrb[0].mxu0
    %277 = vmatprep.mubr.f32.mxu0 0.0
    %278 = vmatmul.mubr.f32.gmra.mrb[0].mxu0 %v118
    %v279 = vpop.f32.mrb[0].mxu0
    %v280 = vadd.f32 %v141, %v279
    %v281 = vpop.f32.mrb[0].mxu0
    %282 = vmatprep.mubr.f32.mxu0 0.0
    %283 = vmatmul.mubr.f32.gmra.mrb[0].mxu0 %v119
    %v284 = vpop.f32.mrb[0].mxu0
    %v285 = vadd.f32 %v141, %v284
    %v286 = vpop.f32.mrb[0].mxu0
    %287 = vdwg.mxu0
    %v288 = vpack.c.bf16 %v215, %v210
    %v289 = vpack.c.bf16 %v225, %v220
    %v290 = vpack.c.bf16 %v235, %v230
    %v291 = vpack.c.bf16 %v245, %v240
    %v292 = vpack.c.bf16 %v255, %v250
    %v293 = vpack.c.bf16 %v265, %v260
    %v294 = vpack.c.bf16 %v275, %v270
    %v295 = vpack.c.bf16 %v285, %v280
    %296 = vmatprep.subr.bf16.mxu0 0
    %297 = vmatpush1.bf16.msra.mxu0 %v288
    %298 = vmatprep.subr.bf16.mxu0 0
    %299 = vmatpush1.bf16.msra.mxu0 %v289
    %300 = vmatprep.subr.bf16.mxu0 0
    %301 = vmatpush1.bf16.msra.mxu0 %v290
    %302 = vmatprep.subr.bf16.mxu0 0
    %303 = vmatpush1.bf16.msra.mxu0 %v291
    %304 = vmatprep.subr.bf16.mxu0 0
    %305 = vmatpush1.bf16.msra.mxu0 %v292
    %306 = vmatprep.subr.bf16.mxu0 0
    %307 = vmatpush1.bf16.msra.mxu0 %v293
    %308 = vmatprep.subr.bf16.mxu0 0
    %309 = vmatpush1.bf16.msra.mxu0 %v294
    %310 = vmatprep.subr.bf16.mxu0 0
    %311 = vmatpush1.bf16.msra.mxu0 %v295
    %312 = vmatprep.subr.bf16.mxu0 0
    %313 = vmatpush1.bf16.msra.mxu0 0
    %314 = vmatprep.subr.bf16.mxu0 0
    %315 = vmatpush1.bf16.msra.mxu0 0
    %316 = vmatprep.subr.bf16.mxu0 0
    %317 = vmatpush1.bf16.msra.mxu0 0
    %318 = vmatprep.subr.bf16.mxu0 0
    %319 = vmatpush1.bf16.msra.mxu0 0
    %320 = vmatprep.subr.bf16.mxu0 0
    %321 = vmatpush1.bf16.msra.mxu0 0
    %322 = vmatprep.subr.bf16.mxu0 0
    %323 = vmatpush1.bf16.msra.mxu0 0
    %324 = vmatprep.subr.bf16.mxu0 0
    %325 = vmatpush1.bf16.msra.mxu0 0
    %326 = vmatprep.subr.bf16.mxu0 0
    %327 = vmatpush1.bf16.msra.mxu0 0
    %328 = vmatprep.mubr.bf16.mxu0 0
    %329 = vmatmul.mubr.bf16.gmra.mrb[0].mxu0 %v96
    %v330 = vpop.f32.mrb[0].mxu0
    %v331 = vadd.f32 0.0, %v330
    %v332 = vpop.f32.mrb[0].mxu0
    %v333 = vpop.f32.mrb[0].mxu0
    %v334 = vadd.f32 0.0, %v333
    %v335 = vpop.f32.mrb[0].mxu0
    %336 = vmatprep.mubr.bf16.mxu0 0
    %337 = vmatmul.mubr.bf16.gmra.mrb[0].mxu0 %v97
    %v338 = vpop.f32.mrb[0].mxu0
    %v339 = vadd.f32 0.0, %v338
    %v340 = vpop.f32.mrb[0].mxu0
    %v341 = vpop.f32.mrb[0].mxu0
    %v342 = vadd.f32 0.0, %v341
    %v343 = vpop.f32.mrb[0].mxu0
    %344 = vmatprep.mubr.bf16.mxu0 0
    %345 = vmatmul.mubr.bf16.gmra.mrb[0].mxu0 %v98
    %v346 = vpop.f32.mrb[0].mxu0
    %v347 = vadd.f32 0.0, %v346
    %v348 = vpop.f32.mrb[0].mxu0
    %v349 = vpop.f32.mrb[0].mxu0
    %v350 = vadd.f32 0.0, %v349
    %v351 = vpop.f32.mrb[0].mxu0
    %352 = vmatprep.mubr.bf16.mxu0 0
    %353 = vmatmul.mubr.bf16.gmra.mrb[0].mxu0 %v99
    %v354 = vpop.f32.mrb[0].mxu0
    %v355 = vadd.f32 0.0, %v354
    %v356 = vpop.f32.mrb[0].mxu0
    %v357 = vpop.f32.mrb[0].mxu0
    %v358 = vadd.f32 0.0, %v357
    %v359 = vpop.f32.mrb[0].mxu0
    %360 = vmatprep.mubr.bf16.mxu0 0
    %361 = vmatmul.mubr.bf16.gmra.mrb[0].mxu0 %v100
    %v362 = vpop.f32.mrb[0].mxu0
    %v363 = vadd.f32 0.0, %v362
    %v364 = vpop.f32.mrb[0].mxu0
    %v365 = vpop.f32.mrb[0].mxu0
    %v366 = vadd.f32 0.0, %v365
    %v367 = vpop.f32.mrb[0].mxu0
    %368 = vmatprep.mubr.bf16.mxu0 0
    %369 = vmatmul.mubr.bf16.gmra.mrb[0].mxu0 %v101
    %v370 = vpop.f32.mrb[0].mxu0
    %v371 = vadd.f32 0.0, %v370
    %v372 = vpop.f32.mrb[0].mxu0
    %v373 = vpop.f32.mrb[0].mxu0
    %v374 = vadd.f32 0.0, %v373
    %v375 = vpop.f32.mrb[0].mxu0
    %376 = vmatprep.mubr.bf16.mxu0 0
    %377 = vmatmul.mubr.bf16.gmra.mrb[0].mxu0 %v102
    %v378 = vpop.f32.mrb[0].mxu0
    %v379 = vadd.f32 0.0, %v378
    %v380 = vpop.f32.mrb[0].mxu0
    %v381 = vpop.f32.mrb[0].mxu0
    %v382 = vadd.f32 0.0, %v381
    %v383 = vpop.f32.mrb[0].mxu0
    %384 = vmatprep.mubr.bf16.mxu0 0
    %385 = vmatmul.mubr.bf16.gmra.mrb[0].mxu0 %v103
    %v386 = vpop.f32.mrb[0].mxu0
    %v387 = vadd.f32 0.0, %v386
    %v388 = vpop.f32.mrb[0].mxu0
    %v389 = vpop.f32.mrb[0].mxu0
    %v390 = vadd.f32 0.0, %v389
    %v391 = vpop.f32.mrb[0].mxu0
    %392 = vdwg.mxu0
    %v393 = vmax.f32 %v331, 0.0
    %v394 = vmax.f32 %v334, 0.0
    %v395 = vmax.f32 %v339, 0.0
    %v396 = vmax.f32 %v342, 0.0
    %v397 = vmax.f32 %v347, 0.0
    %v398 = vmax.f32 %v350, 0.0
    %v399 = vmax.f32 %v355, 0.0
    %v400 = vmax.f32 %v358, 0.0
    %v401 = vmax.f32 %v363, 0.0
    %v402 = vmax.f32 %v366, 0.0
    %v403 = vmax.f32 %v371, 0.0
    %v404 = vmax.f32 %v374, 0.0
    %v405 = vmax.f32 %v379, 0.0
    %v406 = vmax.f32 %v382, 0.0
    %v407 = vmax.f32 %v387, 0.0
    %v408 = vmax.f32 %v390, 0.0
    %v409 = vld [vmem:[#allocation8] sm:$0xff]
    %v410 = vld [vmem:[#allocation8 + $0x8] sm:$0xff]
    %v411 = vld [vmem:[#allocation8 + $0x10] sm:$0xff]
    %v412 = vld [vmem:[#allocation8 + $0x18] sm:$0xff]
    %v413 = vld [vmem:[#allocation8 + $0x20] sm:$0xff]
    %v414 = vld [vmem:[#allocation8 + $0x28] sm:$0xff]
    %v415 = vld [vmem:[#allocation8 + $0x30] sm:$0xff]
    %v416 = vld [vmem:[#allocation8 + $0x38] sm:$0xff]
    %v417 = vld [vmem:[#allocation8 + $0x40] sm:$0xff]
    %v418 = vld [vmem:[#allocation8 + $0x48] sm:$0xff]
    %v419 = vld [vmem:[#allocation8 + $0x50] sm:$0xff]
    %v420 = vld [vmem:[#allocation8 + $0x58] sm:$0xff]
    %v421 = vld [vmem:[#allocation8 + $0x60] sm:$0xff]
    %v422 = vld [vmem:[#allocation8 + $0x68] sm:$0xff]
    %v423 = vld [vmem:[#allocation8 + $0x70] sm:$0xff]
    %v424 = vld [vmem:[#allocation8 + $0x78] sm:$0xff]
    %v425 = vld [vmem:[%s5] sm:$0x1]
    %v427 = vlaneseq
    %v428 = vshrl.u32 %v427, 7
    %v429 = vsub.s32 0, %v428
    %v430 = vrot.slane %v425, %v429
    %432 = vmatprep.subr.mxu0 0.0
    %433 = vmatpush1.msra.mxu0 %v409
    %434 = vmatprep.subr.mxu0 0.0
    %435 = vmatpush1.msra.mxu0 %v410
    %436 = vmatprep.subr.mxu0 0.0
    %437 = vmatpush1.msra.mxu0 %v411
    %438 = vmatprep.subr.mxu0 0.0
    %439 = vmatpush1.msra.mxu0 %v412
    %440 = vmatprep.subr.mxu0 0.0
    %441 = vmatpush1.msra.mxu0 %v413
    %442 = vmatprep.subr.mxu0 0.0
    %443 = vmatpush1.msra.mxu0 %v414
    %444 = vmatprep.subr.mxu0 0.0
    %445 = vmatpush1.msra.mxu0 %v415
    %446 = vmatprep.subr.mxu0 0.0
    %447 = vmatpush1.msra.mxu0 %v416
    %448 = vmatprep.subr.mxu0 0.0
    %449 = vmatpush1.msra.mxu0 %v417
    %450 = vmatprep.subr.mxu0 0.0
    %451 = vmatpush1.msra.mxu0 %v418
    %452 = vmatprep.subr.mxu0 0.0
    %453 = vmatpush1.msra.mxu0 %v419
    %454 = vmatprep.subr.mxu0 0.0
    %455 = vmatpush1.msra.mxu0 %v420
    %456 = vmatprep.subr.mxu0 0.0
    %457 = vmatpush1.msra.mxu0 %v421
    %458 = vmatprep.subr.mxu0 0.0
    %459 = vmatpush1.msra.mxu0 %v422
    %460 = vmatprep.subr.mxu0 0.0
    %461 = vmatpush1.msra.mxu0 %v423
    %462 = vmatprep.subr.mxu0 0.0
    %463 = vmatpush1.msra.mxu0 %v424
    %464 = vmatprep.subr.mxu0 0.0
    %465 = vmatpush1.msra.mxu0 0.0
    %466 = vmatprep.subr.mxu0 0.0
    %467 = vmatpush1.msra.mxu0 0.0
    %468 = vmatprep.subr.mxu0 0.0
    %469 = vmatpush1.msra.mxu0 0.0
    %470 = vmatprep.subr.mxu0 0.0
    %471 = vmatpush1.msra.mxu0 0.0
    %472 = vmatprep.subr.mxu0 0.0
    %473 = vmatpush1.msra.mxu0 0.0
    %474 = vmatprep.subr.mxu0 0.0
    %475 = vmatpush1.msra.mxu0 0.0
    %476 = vmatprep.subr.mxu0 0.0
    %477 = vmatpush1.msra.mxu0 0.0
    %478 = vmatprep.subr.mxu0 0.0
    %479 = vmatpush1.msra.mxu0 0.0
    %480 = vmatprep.subr.mxu0 0.0
    %481 = vmatpush1.msra.mxu0 0.0
    %482 = vmatprep.subr.mxu0 0.0
    %483 = vmatpush1.msra.mxu0 0.0
    %484 = vmatprep.subr.mxu0 0.0
    %485 = vmatpush1.msra.mxu0 0.0
    %486 = vmatprep.subr.mxu0 0.0
    %487 = vmatpush1.msra.mxu0 0.0
    %488 = vmatprep.subr.mxu0 0.0
    %489 = vmatpush1.msra.mxu0 0.0
    %490 = vmatprep.subr.mxu0 0.0
    %491 = vmatpush1.msra.mxu0 0.0
    %492 = vmatprep.subr.mxu0 0.0
    %493 = vmatpush1.msra.mxu0 0.0
    %494 = vmatprep.subr.mxu0 0.0
    %495 = vmatpush1.msra.mxu0 0.0
    %496 = vmatprep.mubr.f32.mxu0 0.0
    %497 = vmatmul.mubr.f32.gmra.mrb[0].mxu0 %v393
    %v498 = vpop.f32.mrb[0].mxu0
    %v499 = vadd.f32 %v430, %v498
    %v500 = vpop.f32.mrb[0].mxu0
    %501 = vmatprep.mubr.f32.mxu0 0.0
    %502 = vmatmul.mubr.f32.gmra.mrb[0].mxu0 %v394
    %v503 = vpop.f32.mrb[0].mxu0
    %v504 = vadd.f32 %v430, %v503
    %v505 = vpop.f32.mrb[0].mxu0
    %506 = vmatprep.mubr.f32.mxu0 0.0
    %507 = vmatmul.mubr.f32.gmra.mrb[0].mxu0 %v395
    %v508 = vpop.f32.mrb[0].mxu0
    %v509 = vadd.f32 %v430, %v508
    %v510 = vpop.f32.mrb[0].mxu0
    %511 = vmatprep.mubr.f32.mxu0 0.0
    %512 = vmatmul.mubr.f32.gmra.mrb[0].mxu0 %v396
    %v513 = vpop.f32.mrb[0].mxu0
    %v514 = vadd.f32 %v430, %v513
    %v515 = vpop.f32.mrb[0].mxu0
    %516 = vmatprep.mubr.f32.mxu0 0.0
    %517 = vmatmul.mubr.f32.gmra.mrb[0].mxu0 %v397
    %v518 = vpop.f32.mrb[0].mxu0
    %v519 = vadd.f32 %v430, %v518
    %v520 = vpop.f32.mrb[0].mxu0
    %521 = vmatprep.mubr.f32.mxu0 0.0
    %522 = vmatmul.mubr.f32.gmra.mrb[0].mxu0 %v398
    %v523 = vpop.f32.mrb[0].mxu0
    %v524 = vadd.f32 %v430, %v523
    %v525 = vpop.f32.mrb[0].mxu0
    %526 = vmatprep.mubr.f32.mxu0 0.0
    %527 = vmatmul.mubr.f32.gmra.mrb[0].mxu0 %v399
    %v528 = vpop.f32.mrb[0].mxu0
    %v529 = vadd.f32 %v430, %v528
    %v530 = vpop.f32.mrb[0].mxu0
    %531 = vmatprep.mubr.f32.mxu0 0.0
    %532 = vmatmul.mubr.f32.gmra.mrb[0].mxu0 %v400
    %v533 = vpop.f32.mrb[0].mxu0
    %v534 = vadd.f32 %v430, %v533
    %v535 = vpop.f32.mrb[0].mxu0
    %536 = vmatprep.mubr.f32.mxu0 0.0
    %537 = vmatmul.mubr.f32.gmra.mrb[0].mxu0 %v401
    %v538 = vpop.f32.mrb[0].mxu0
    %v539 = vadd.f32 %v430, %v538
    %v540 = vpop.f32.mrb[0].mxu0
    %541 = vmatprep.mubr.f32.mxu0 0.0
    %542 = vmatmul.mubr.f32.gmra.mrb[0].mxu0 %v402
    %v543 = vpop.f32.mrb[0].mxu0
    %v544 = vadd.f32 %v430, %v543
    %v545 = vpop.f32.mrb[0].mxu0
    %546 = vmatprep.mubr.f32.mxu0 0.0
    %547 = vmatmul.mubr.f32.gmra.mrb[0].mxu0 %v403
    %v548 = vpop.f32.mrb[0].mxu0
    %v549 = vadd.f32 %v430, %v548
    %v550 = vpop.f32.mrb[0].mxu0
    %551 = vmatprep.mubr.f32.mxu0 0.0
    %552 = vmatmul.mubr.f32.gmra.mrb[0].mxu0 %v404
    %v553 = vpop.f32.mrb[0].mxu0
    %v554 = vadd.f32 %v430, %v553
    %v555 = vpop.f32.mrb[0].mxu0
    %556 = vmatprep.mubr.f32.mxu0 0.0
    %557 = vmatmul.mubr.f32.gmra.mrb[0].mxu0 %v405
    %v558 = vpop.f32.mrb[0].mxu0
    %v559 = vadd.f32 %v430, %v558
    %v560 = vpop.f32.mrb[0].mxu0
    %561 = vmatprep.mubr.f32.mxu0 0.0
    %562 = vmatmul.mubr.f32.gmra.mrb[0].mxu0 %v406
    %v563 = vpop.f32.mrb[0].mxu0
    %v564 = vadd.f32 %v430, %v563
    %v565 = vpop.f32.mrb[0].mxu0
    %566 = vmatprep.mubr.f32.mxu0 0.0
    %567 = vmatmul.mubr.f32.gmra.mrb[0].mxu0 %v407
    %v568 = vpop.f32.mrb[0].mxu0
    %v569 = vadd.f32 %v430, %v568
    %v570 = vpop.f32.mrb[0].mxu0
    %571 = vmatprep.mubr.f32.mxu0 0.0
    %572 = vmatmul.mubr.f32.gmra.mrb[0].mxu0 %v408
    %v573 = vpop.f32.mrb[0].mxu0
    %v574 = vadd.f32 %v430, %v573
    %v575 = vpop.f32.mrb[0].mxu0
    %576 = vdwg.mxu0
    %v577 = vpack.c.bf16 %v504, %v499
    %v578 = vpack.c.bf16 %v514, %v509
    %v579 = vpack.c.bf16 %v524, %v519
    %v580 = vpack.c.bf16 %v534, %v529
    %v581 = vpack.c.bf16 %v544, %v539
    %v582 = vpack.c.bf16 %v554, %v549
    %v583 = vpack.c.bf16 %v564, %v559
    %v584 = vpack.c.bf16 %v574, %v569
    %585 = vmatprep.subr.bf16.mxu0 0
    %586 = vmatpush1.bf16.msra.mxu0 %v577
    %587 = vmatprep.subr.bf16.mxu0 0
    %588 = vmatpush1.bf16.msra.mxu0 %v578
    %589 = vmatprep.subr.bf16.mxu0 0
    %590 = vmatpush1.bf16.msra.mxu0 %v579
    %591 = vmatprep.subr.bf16.mxu0 0
    %592 = vmatpush1.bf16.msra.mxu0 %v580
    %593 = vmatprep.subr.bf16.mxu0 0
    %594 = vmatpush1.bf16.msra.mxu0 %v581
    %595 = vmatprep.subr.bf16.mxu0 0
    %596 = vmatpush1.bf16.msra.mxu0 %v582
    %597 = vmatprep.subr.bf16.mxu0 0
    %598 = vmatpush1.bf16.msra.mxu0 %v583
    %599 = vmatprep.subr.bf16.mxu0 0
    %600 = vmatpush1.bf16.msra.mxu0 %v584
    %601 = vmatprep.subr.bf16.mxu0 0
    %602 = vmatpush1.bf16.msra.mxu0 0
    %603 = vmatprep.subr.bf16.mxu0 0
    %604 = vmatpush1.bf16.msra.mxu0 0
    %605 = vmatprep.subr.bf16.mxu0 0
    %606 = vmatpush1.bf16.msra.mxu0 0
    %607 = vmatprep.subr.bf16.mxu0 0
    %608 = vmatpush1.bf16.msra.mxu0 0
    %609 = vmatprep.subr.bf16.mxu0 0
    %610 = vmatpush1.bf16.msra.mxu0 0
    %611 = vmatprep.subr.bf16.mxu0 0
    %612 = vmatpush1.bf16.msra.mxu0 0
    %613 = vmatprep.subr.bf16.mxu0 0
    %614 = vmatpush1.bf16.msra.mxu0 0
    %615 = vmatprep.subr.bf16.mxu0 0
    %616 = vmatpush1.bf16.msra.mxu0 0
    %617 = vmatprep.mubr.bf16.mxu0 0
    %618 = vmatmul.mubr.bf16.gmra.mrb[0].mxu0 %v96
    %v619 = vpop.f32.mrb[0].mxu0
    %v620 = vadd.f32 0.0, %v619
    %v621 = vpop.f32.mrb[0].mxu0
    %v622 = vpop.f32.mrb[0].mxu0
    %v623 = vadd.f32 0.0, %v622
    %v624 = vpop.f32.mrb[0].mxu0
    %625 = vmatprep.mubr.bf16.mxu0 0
    %626 = vmatmul.mubr.bf16.gmra.mrb[0].mxu0 %v97
    %v627 = vpop.f32.mrb[0].mxu0
    %v628 = vadd.f32 0.0, %v627
    %v629 = vpop.f32.mrb[0].mxu0
    %v630 = vpop.f32.mrb[0].mxu0
    %v631 = vadd.f32 0.0, %v630
    %v632 = vpop.f32.mrb[0].mxu0
    %633 = vmatprep.mubr.bf16.mxu0 0
    %634 = vmatmul.mubr.bf16.gmra.mrb[0].mxu0 %v98
    %v635 = vpop.f32.mrb[0].mxu0
    %v636 = vadd.f32 0.0, %v635
    %v637 = vpop.f32.mrb[0].mxu0
    %v638 = vpop.f32.mrb[0].mxu0
    %v639 = vadd.f32 0.0, %v638
    %v640 = vpop.f32.mrb[0].mxu0
    %641 = vmatprep.mubr.bf16.mxu0 0
    %642 = vmatmul.mubr.bf16.gmra.mrb[0].mxu0 %v99
    %v643 = vpop.f32.mrb[0].mxu0
    %v644 = vadd.f32 0.0, %v643
    %v645 = vpop.f32.mrb[0].mxu0
    %v646 = vpop.f32.mrb[0].mxu0
    %v647 = vadd.f32 0.0, %v646
    %v648 = vpop.f32.mrb[0].mxu0
    %649 = vmatprep.mubr.bf16.mxu0 0
    %650 = vmatmul.mubr.bf16.gmra.mrb[0].mxu0 %v100
    %v651 = vpop.f32.mrb[0].mxu0
    %v652 = vadd.f32 0.0, %v651
    %v653 = vpop.f32.mrb[0].mxu0
    %v654 = vpop.f32.mrb[0].mxu0
    %v655 = vadd.f32 0.0, %v654
    %v656 = vpop.f32.mrb[0].mxu0
    %657 = vmatprep.mubr.bf16.mxu0 0
    %658 = vmatmul.mubr.bf16.gmra.mrb[0].mxu0 %v101
    %v659 = vpop.f32.mrb[0].mxu0
    %v660 = vadd.f32 0.0, %v659
    %v661 = vpop.f32.mrb[0].mxu0
    %v662 = vpop.f32.mrb[0].mxu0
    %v663 = vadd.f32 0.0, %v662
    %v664 = vpop.f32.mrb[0].mxu0
    %665 = vmatprep.mubr.bf16.mxu0 0
    %666 = vmatmul.mubr.bf16.gmra.mrb[0].mxu0 %v102
    %v667 = vpop.f32.mrb[0].mxu0
    %v668 = vadd.f32 0.0, %v667
    %v669 = vpop.f32.mrb[0].mxu0
    %v670 = vpop.f32.mrb[0].mxu0
    %v671 = vadd.f32 0.0, %v670
    %v672 = vpop.f32.mrb[0].mxu0
    %673 = vmatprep.mubr.bf16.mxu0 0
    %674 = vmatmul.mubr.bf16.gmra.mrb[0].mxu0 %v103
    %v675 = vpop.f32.mrb[0].mxu0
    %v676 = vadd.f32 0.0, %v675
    %v677 = vpop.f32.mrb[0].mxu0
    %v678 = vpop.f32.mrb[0].mxu0
    %v679 = vadd.f32 0.0, %v678
    %v680 = vpop.f32.mrb[0].mxu0
    %681 = vdwg.mxu0
    %682 = vst [vmem:[#allocation10] sm:$0xff] %v620
    %683 = vst [vmem:[#allocation10 + $0x8] sm:$0xff] %v623
    %684 = vst [vmem:[#allocation10 + $0x10] sm:$0xff] %v628
    %685 = vst [vmem:[#allocation10 + $0x18] sm:$0xff] %v631
    %686 = vst [vmem:[#allocation10 + $0x20] sm:$0xff] %v636
    %687 = vst [vmem:[#allocation10 + $0x28] sm:$0xff] %v639
    %688 = vst [vmem:[#allocation10 + $0x30] sm:$0xff] %v644
    %689 = vst [vmem:[#allocation10 + $0x38] sm:$0xff] %v647
    %690 = vst [vmem:[#allocation10 + $0x40] sm:$0xff] %v652
    %691 = vst [vmem:[#allocation10 + $0x48] sm:$0xff] %v655
    %692 = vst [vmem:[#allocation10 + $0x50] sm:$0xff] %v660
    %693 = vst [vmem:[#allocation10 + $0x58] sm:$0xff] %v663
    %694 = vst [vmem:[#allocation10 + $0x60] sm:$0xff] %v668
    %695 = vst [vmem:[#allocation10 + $0x68] sm:$0xff] %v671
    %696 = vst [vmem:[#allocation10 + $0x70] sm:$0xff] %v676
    %697 = vst [vmem:[#allocation10 + $0x78] sm:$0xff] %v679
    // Predicated region
    $region42: #{tpu_custom_call.1} parent=1 // pred_check
      _
    $region43: #{tpu_custom_call.1} parent=1 // pred_check_branch
      %699 = sbr.rel (0) target = $region45
    $region44: #{tpu_custom_call.1} parent=1 // pred_region
      %s701 = ssub.s32 2048, 2048
      %702 = vsyncadd [#allocation4], %s701
      %s703 = sshll.u32 [#allocation10], 4
      %s704 = int_to_ptr.vmem [resolvable:$true] %s703
      %709 = dma.vmem_to_hbm [thread:$0]  %s704, 2048, %s6, [#allocation4], 128, 128, 8
    $region45: #{tpu_custom_call.1} parent=1 // pred_fallthru
      _
    // Predicated region
    $region46: #{tpu_custom_call.1} parent=1 // pred_check
      _
    $region47: #{tpu_custom_call.1} parent=1 // pred_check_branch
      %711 = sbr.rel (0) target = $region49
    $region48: #{tpu_custom_call.1} parent=1 // pred_region
      %712 = dma.done [#allocation4], 2048
    $region49: #{tpu_custom_call.1} parent=1 // pred_fallthru
      _
    %713 = vsyncpa [#allocation3], 1
    %714 = vsyncpa [#allocation6], 1
    %715 = vsyncpa [#allocation9], 1
    %716 = vsyncpa [#allocation4], 1

</llo_original>
